<compile_context>
chip_gen: v6e
topology: v6e:2x2x1
jax: 0.10.0
libtpu: 0.0.40
codegen_flags: <defaults>
</compile_context>

<pallas_src>
import jax
import jax.numpy as jnp
from jax.experimental import pallas as pl
from jax.experimental.pallas import tpu as pltpu


# ------------------------------- the kernel -------------------------------

def _pil_kernel(x_ref, c_ref, w_ref, b_ref, gamma_ref, o_ref):
    x = x_ref[...].astype(jnp.float32)
    c = c_ref[...].astype(jnp.float32)
    # constraint = Linear(c): single MXU matmul, f32 accumulation.
    constraint = jnp.dot(c, w_ref[...], preferred_element_type=jnp.float32)
    constraint = constraint + b_ref[...]
    gamma = gamma_ref[0, 0]                       # scalar from SMEM
    o_ref[...] = (x + gamma * constraint).astype(o_ref.dtype)


# ------------------------------- the wrapper -------------------------------

def physics_informed_layer(x, c, w, b, gamma, *, block_b=256):
    """x: (B, dim), c: (B, cond_dim), w: (cond_dim, dim), b: (1, dim),
    gamma: (1, 1) scalar parameter."""
    B, dim = x.shape
    cond_dim = c.shape[1]

    # Batch tile: whole batch if it is small, otherwise 8-aligned tiles.
    tb = B if B <= block_b else block_b
    Bp = pl.cdiv(B, tb) * tb
    if Bp != B:
        pad = Bp - B
        x = jnp.pad(x, ((0, pad), (0, 0)))
        c = jnp.pad(c, ((0, pad), (0, 0)))
    grid = (Bp // tb,)

    bytes_accessed = 4 * (Bp * dim * 2 + Bp * cond_dim + cond_dim * dim + dim + 1)
    cost = pl.CostEstimate(
        flops=2 * Bp * cond_dim * dim + 3 * Bp * dim,
        transcendentals=0,
        bytes_accessed=bytes_accessed,
    )

    out = pl.pallas_call(
        _pil_kernel,
        out_shape=jax.ShapeDtypeStruct((Bp, dim), x.dtype),
        grid=grid,
        in_specs=[
            pl.BlockSpec((tb, dim), lambda i: (i, 0)),        # x (batch-tiled)
            pl.BlockSpec((tb, cond_dim), lambda i: (i, 0)),   # c (batch-tiled)
            pl.BlockSpec((cond_dim, dim), lambda i: (0, 0)),  # W (resident)
            pl.BlockSpec((1, dim), lambda i: (0, 0)),         # b (resident)
            pl.BlockSpec((1, 1), lambda i: (0, 0),            # gamma -> SMEM
                         memory_space=pltpu.MemorySpace.SMEM),
        ],
        out_specs=pl.BlockSpec((tb, dim), lambda i: (i, 0)),
        compiler_params=pltpu.CompilerParams(
            dimension_semantics=("parallel",)),
        cost_estimate=cost,
    )(x, c, w, b, gamma)

    return out[:B] if Bp != B else out


# --------------------------- params / reference ---------------------------

def init_params(key, dim, cond_dim):
    kw, kb = jax.random.split(key)
    # Linear(cond_dim, dim): weight stored transposed vs torch -> (cond_dim, dim)
    w = (0.1 * jax.random.normal(kw, (cond_dim, dim))).astype(jnp.float32)
    b = (0.05 * jax.random.normal(kb, (1, dim))).astype(jnp.float32)
    gamma = jnp.full((1, 1), 0.1, jnp.float32)   # nn.Parameter(ones(1) * 0.1)
    return w, b, gamma


def reference_forward(x, c, w, b, gamma):
    return x + gamma[0, 0] * (c @ w + b)


# ----------------------------------- main -----------------------------------

if __name__ == "__main__":
    B, DIM, COND_DIM = 8, 32, 16

    key = jax.random.PRNGKey(0)
    kx, kc, kp = jax.random.split(key, 3)

    x = jax.random.normal(kx, (B, DIM), jnp.float32)
    c = jax.random.normal(kc, (B, COND_DIM), jnp.float32)
    w, b, gamma = init_params(kp, DIM, COND_DIM)

    out = physics_informed_layer(x, c, w, b, gamma)
    out = jax.block_until_ready(out)

    ref = reference_forward(x, c, w, b, gamma)
    assert out.shape == (B, DIM), out.shape
    assert jnp.allclose(out, ref, atol=1e-5, rtol=1e-5), (
        float(jnp.max(jnp.abs(out - ref))))

    print("KERNEL_OK")
</pallas_src>

<mosaic_0001>
module attributes {stable_mosaic.version = 11 : i64} {
  func.func @_pil_kernel(%arg0: i32, %arg1: memref<8x32xf32, #tpu.memory_space<vmem>>, %arg2: memref<8x16xf32, #tpu.memory_space<vmem>>, %arg3: memref<16x32xf32, #tpu.memory_space<vmem>>, %arg4: memref<1x32xf32, #tpu.memory_space<vmem>>, %arg5: memref<1x1xf32, #tpu.memory_space<smem>>, %arg6: memref<8x32xf32, #tpu.memory_space<vmem>>) attributes {dimension_semantics = [#tpu.dimension_semantics<parallel>], iteration_bounds = array<i64: 1>, scalar_prefetch = 0 : i64, scratch_operands = 0 : i64, tpu.core_type = #tpu.core_type<tc>, window_params = [{transform_indices = @transform_0, window_bounds = array<i64: 8, 32>}, {transform_indices = @transform_1, window_bounds = array<i64: 8, 16>}, {pipeline_mode = #tpu.pipeline_mode<synchronous>, transform_indices = @transform_2, window_bounds = array<i64: 16, 32>}, {pipeline_mode = #tpu.pipeline_mode<synchronous>, transform_indices = @transform_3, window_bounds = array<i64: 1, 32>}, {transform_indices = @transform_4, window_bounds = array<i64: 1, 1>}, {transform_indices = @transform_5, window_bounds = array<i64: 8, 32>}]} {
    %c0 = arith.constant 0 : index
    %c0_0 = arith.constant 0 : index
    %0 = vector.load %arg1[%c0, %c0_0] : memref<8x32xf32, #tpu.memory_space<vmem>>, vector<8x32xf32>
    %c0_1 = arith.constant 0 : index
    %c0_2 = arith.constant 0 : index
    %1 = vector.load %arg2[%c0_1, %c0_2] : memref<8x16xf32, #tpu.memory_space<vmem>>, vector<8x16xf32>
    %c0_3 = arith.constant 0 : index
    %c0_4 = arith.constant 0 : index
    %2 = vector.load %arg3[%c0_3, %c0_4] : memref<16x32xf32, #tpu.memory_space<vmem>>, vector<16x32xf32>
    %cst = arith.constant dense<0.000000e+00> : vector<8x32xf32>
    %3 = tpu.matmul %1, %2, %cst {dimension_numbers = #tpu.dot_dimension_numbers<[1], [0], [0], [1], [0, 0, 1, 1], [], []>} : vector<8x16xf32>, vector<16x32xf32>, vector<8x32xf32> -> vector<8x32xf32>
    %c0_5 = arith.constant 0 : index
    %c0_6 = arith.constant 0 : index
    %4 = vector.load %arg4[%c0_5, %c0_6] : memref<1x32xf32, #tpu.memory_space<vmem>>, vector<1x32xf32>
    %5 = vector.broadcast %4 : vector<1x32xf32> to vector<8x32xf32>
    %6 = arith.addf %3, %5 : vector<8x32xf32>
    %c0_7 = arith.constant 0 : index
    %c0_8 = arith.constant 0 : index
    %7 = memref.load %arg5[%c0_7, %c0_8] : memref<1x1xf32, #tpu.memory_space<smem>>
    %8 = vector.broadcast %7 : f32 to vector<8x32xf32>
    %9 = arith.mulf %8, %6 : vector<8x32xf32>
    %10 = arith.addf %0, %9 : vector<8x32xf32>
    %c0_9 = arith.constant 0 : index
    %c0_10 = arith.constant 0 : index
    %11 = vector.load %arg6[%c0_9, %c0_10] : memref<8x32xf32, #tpu.memory_space<vmem>>, vector<8x32xf32>
    tpu.vector_store %arg6[%c0_9, %c0_10], %10 {strides = array<i32>} : memref<8x32xf32, #tpu.memory_space<vmem>>, vector<8x32xf32>,
    return
  }
  func.func @transform_0(%arg0: i32) -> (i32, i32) {
    %c0_i32 = arith.constant 0 : i32
    %c0_i32_0 = arith.constant 0 : i32
    return %arg0, %c0_i32 : i32, i32
  }
  func.func @transform_1(%arg0: i32) -> (i32, i32) {
    %c0_i32 = arith.constant 0 : i32
    %c0_i32_0 = arith.constant 0 : i32
    return %arg0, %c0_i32 : i32, i32
  }
  func.func @transform_2(%arg0: i32) -> (i32, i32) {
    %c0_i32 = arith.constant 0 : i32
    %c0_i32_0 = arith.constant 0 : i32
    %c0_i32_1 = arith.constant 0 : i32
    return %c0_i32, %c0_i32_0 : i32, i32
  }
  func.func @transform_3(%arg0: i32) -> (i32, i32) {
    %c0_i32 = arith.constant 0 : i32
    %c0_i32_0 = arith.constant 0 : i32
    %c0_i32_1 = arith.constant 0 : i32
    return %c0_i32, %c0_i32_0 : i32, i32
  }
  func.func @transform_4(%arg0: i32) -> (i32, i32) {
    %c0_i32 = arith.constant 0 : i32
    %c0_i32_0 = arith.constant 0 : i32
    %c0_i32_1 = arith.constant 0 : i32
    return %c0_i32, %c0_i32_0 : i32, i32
  }
  func.func @transform_5(%arg0: i32) -> (i32, i32) {
    %c0_i32 = arith.constant 0 : i32
    %c0_i32_0 = arith.constant 0 : i32
    return %arg0, %c0_i32 : i32, i32
  }
}

</mosaic_0001>

<llo_original>
// kernel: tpu_custom_call.1
$region0: #{tpu_custom_call.1}
  #allocation0 [shape = 'u32[]', space=smem, size = 0x4, offset = 0x4, fixed_abs, tag = 'smem constant byte address 0x4 - core index']
  #allocation1 [shape = 'u32[144,128]{1,0:T(1,128)}', space=vmem, size = 0x12000, scoped, tag = 'internal scratch']
  #allocation2 [shape = 'f32[1,1]{1,0:T(1,128)S(6)}', space=smem, size = 0x200, scoped, tag = 'scoped memory for tpu_custom_call.1']
  %s0 = inlined_call_operand.hbm [shape: f32[8,32], index: 0, kind: input, shape index: {}]
  %s1 = inlined_call_operand.hbm [shape: f32[8,16], index: 1, kind: input, shape index: {}]
  %s2 = inlined_call_operand.hbm [shape: f32[16,32], index: 2, kind: input, shape index: {}]
  %s3 = inlined_call_operand.vmem [shape: f32[1,32], index: 3, kind: input, shape index: {}]
  %s4 = inlined_call_operand.<no memory space> [shape: f32[1,1], index: 4, kind: input, shape index: {}]
  %s5 = inlined_call_operand.hbm [shape: f32[8,32], index: 5, kind: output, shape index: {}]
  %s6 = sld [smem:[#allocation0]]
  $region42: #{tpu_custom_call.1} parent=0
    _
  %s8 = ssub.s32 1, %s6
  %s9 = scalar_select 0, %s8, %s6
  %10 = sst [smem:[#allocation2]] %s4
  $region1: #{tpu_custom_call.1} parent=0
    #allocation3 [shape = 'u8[4096]{0}', space=vmem, size = 0x1000, scoped, tag = 'input window, operand 0, single buffered']
    #allocation4 [shape = 's32[1]{0}', space=sflag, size = 0x4, scoped, tag = 'scoped memory for tpu_custom_call.1']
    #allocation5 [shape = 's32[1]{0}', space=sflag, size = 0x4, scoped, tag = 'scoped memory for tpu_custom_call.1']
    #allocation6 [shape = 'u8[4096]{0}', space=vmem, size = 0x1000, scoped, tag = 'input window, operand 1, single buffered']
    #allocation7 [shape = 's32[1]{0}', space=sflag, size = 0x4, scoped, tag = 'scoped memory for tpu_custom_call.1']
    #allocation8 [shape = 'u8[8192]{0}', space=vmem, size = 0x2000, scoped, tag = 'input window, operand 2, single buffered']
    #allocation9 [shape = 'u8[4096]{0}', space=vmem, size = 0x1000, scoped, tag = 'output window, operand 0, single buffered']
    %11 = vsyncpa [#allocation4], 0
    %12 = vsyncpa [#allocation7], 0
    %13 = vsyncpa [#allocation5], 0
    // Predicated region
    $region2: #{tpu_custom_call.1} parent=1 // pred_check
      _
    $region3: #{tpu_custom_call.1} parent=1 // pred_check_branch
      %15 = sbr.rel (0) target = $region5
    $region4: #{tpu_custom_call.1} parent=1 // pred_region
      %s17 = ssub.s32 128, 128
      %18 = vsyncadd [#allocation4], %s17
      %s20 = sshll.u32 [#allocation3], 4
      %s21 = int_to_ptr.vmem [resolvable:$true] %s20
      %23 = dma.hbm_to_vmem [thread:$0]  %s0, 128, %s21, [#allocation4]
    $region5: #{tpu_custom_call.1} parent=1 // pred_fallthru
      _
    // Predicated region
    $region6: #{tpu_custom_call.1} parent=1 // pred_check
      _
    $region7: #{tpu_custom_call.1} parent=1 // pred_check_branch
      %25 = sbr.rel (0) target = $region9
    $region8: #{tpu_custom_call.1} parent=1 // pred_region
      %s27 = ssub.s32 128, 128
      %28 = vsyncadd [#allocation7], %s27
      %s30 = sshll.u32 [#allocation6], 4
      %s31 = int_to_ptr.vmem [resolvable:$true] %s30
      %33 = dma.hbm_to_vmem [thread:$0]  %s1, 128, %s31, [#allocation7]
    $region9: #{tpu_custom_call.1} parent=1 // pred_fallthru
      _
    // Predicated region
    $region10: #{tpu_custom_call.1} parent=1 // pred_check
      _
    $region11: #{tpu_custom_call.1} parent=1 // pred_check_branch
      %35 = sbr.rel (0) target = $region13
    $region12: #{tpu_custom_call.1} parent=1 // pred_region
      %s37 = ssub.s32 256, 256
      %38 = vsyncadd [#allocation7], %s37
      %s39 = sshll.u32 [#allocation8], 4
      %s40 = int_to_ptr.vmem [resolvable:$true] %s39
      %45 = dma.hbm_to_vmem [thread:$0]  %s2, 256, %s40, [#allocation7], 128, 128, 8
    $region13: #{tpu_custom_call.1} parent=1 // pred_fallthru
      _
    // Predicated region
    $region14: #{tpu_custom_call.1} parent=1 // pred_check
      _
    $region15: #{tpu_custom_call.1} parent=1 // pred_check_branch
      %47 = sbr.rel (0) target = $region17
    $region16: #{tpu_custom_call.1} parent=1 // pred_region
      _
    $region17: #{tpu_custom_call.1} parent=1 // pred_fallthru
      _
    // Predicated region
    $region18: #{tpu_custom_call.1} parent=1 // pred_check
      _
    $region19: #{tpu_custom_call.1} parent=1 // pred_check_branch
      %49 = sbr.rel (0) target = $region21
    $region20: #{tpu_custom_call.1} parent=1 // pred_region
      _
    $region21: #{tpu_custom_call.1} parent=1 // pred_fallthru
      _
    // Predicated region
    $region22: #{tpu_custom_call.1} parent=1 // pred_check
      _
    $region23: #{tpu_custom_call.1} parent=1 // pred_check_branch
      %51 = sbr.rel (0) target = $region25
    $region24: #{tpu_custom_call.1} parent=1 // pred_region
      %52 = dma.done [#allocation4], 128
    $region25: #{tpu_custom_call.1} parent=1 // pred_fallthru
      _
    // Predicated region
    $region26: #{tpu_custom_call.1} parent=1 // pred_check
      _
    $region27: #{tpu_custom_call.1} parent=1 // pred_check_branch
      %54 = sbr.rel (0) target = $region29
    $region28: #{tpu_custom_call.1} parent=1 // pred_region
      %55 = dma.done [#allocation7], 128
    $region29: #{tpu_custom_call.1} parent=1 // pred_fallthru
      _
    // Predicated region
    $region30: #{tpu_custom_call.1} parent=1 // pred_check
      _
    $region31: #{tpu_custom_call.1} parent=1 // pred_check_branch
      %57 = sbr.rel (0) target = $region33
    $region32: #{tpu_custom_call.1} parent=1 // pred_region
      %58 = dma.done [#allocation7], 256
    $region33: #{tpu_custom_call.1} parent=1 // pred_fallthru
      _
    %v59 = vld [vmem:[#allocation3] sm:$0xff]
    %v60 = vld [vmem:[#allocation6] sm:$0xff]
    %v61 = vld [vmem:[#allocation8] sm:$0xff]
    %v62 = vld [vmem:[#allocation8 + $0x8] sm:$0xff]
    %v63 = vld [vmem:[%s3] sm:$0x1]
    %v65 = vlaneseq
    %v66 = vshrl.u32 %v65, 7
    %v67 = vsub.s32 0, %v66
    %v68 = vrot.slane %v63, %v67
    %vm70 = vcmask 130048
    %v72 = vsel %vm70, %v60, 0
    %74 = vmatprep.subr.mxu0 0.0
    %75 = vmatpush1.msra.mxu0 0.0
    %76 = vmatprep.subr.mxu0 0.0
    %77 = vmatpush1.msra.mxu0 0.0
    %78 = vmatprep.subr.mxu0 0.0
    %79 = vmatpush1.msra.mxu0 0.0
    %80 = vmatprep.subr.mxu0 0.0
    %81 = vmatpush1.msra.mxu0 0.0
    %82 = vmatprep.subr.mxu0 0.0
    %83 = vmatpush1.msra.mxu0 0.0
    %84 = vmatprep.subr.mxu0 0.0
    %85 = vmatpush1.msra.mxu0 0.0
    %86 = vmatprep.subr.mxu0 0.0
    %87 = vmatpush1.msra.mxu0 0.0
    %88 = vmatprep.subr.mxu0 0.0
    %89 = vmatpush1.msra.mxu0 0.0
    %90 = vmatprep.subr.mxu0 0.0
    %91 = vmatpush1.msra.mxu0 0.0
    %92 = vmatprep.subr.mxu0 0.0
    %93 = vmatpush1.msra.mxu0 0.0
    %94 = vmatprep.subr.mxu0 0.0
    %95 = vmatpush1.msra.mxu0 0.0
    %96 = vmatprep.subr.mxu0 0.0
    %97 = vmatpush1.msra.mxu0 0.0
    %98 = vmatprep.subr.mxu0 0.0
    %99 = vmatpush1.msra.mxu0 0.0
    %100 = vmatprep.subr.mxu0 0.0
    %101 = vmatpush1.msra.mxu0 0.0
    %102 = vmatprep.subr.mxu0 0.0
    %103 = vmatpush1.msra.mxu0 %v62
    %104 = vmatprep.subr.mxu0 0.0
    %105 = vmatpush1.msra.mxu0 %v61
    %106 = vmatprep.subr.mxu0 0.0
    %107 = vmatpush2.msra.mxu0 0.0
    %108 = vmatprep.subr.mxu0 0.0
    %109 = vmatpush2.msra.mxu0 0.0
    %110 = vmatprep.subr.mxu0 0.0
    %111 = vmatpush2.msra.mxu0 0.0
    %112 = vmatprep.subr.mxu0 0.0
    %113 = vmatpush2.msra.mxu0 0.0
    %114 = vmatprep.subr.mxu0 0.0
    %115 = vmatpush2.msra.mxu0 0.0
    %116 = vmatprep.subr.mxu0 0.0
    %117 = vmatpush2.msra.mxu0 0.0
    %118 = vmatprep.subr.mxu0 0.0
    %119 = vmatpush2.msra.mxu0 0.0
    %120 = vmatprep.subr.mxu0 0.0
    %121 = vmatpush2.msra.mxu0 0.0
    %122 = vmatprep.subr.mxu0 0.0
    %123 = vmatpush2.msra.mxu0 0.0
    %124 = vmatprep.subr.mxu0 0.0
    %125 = vmatpush2.msra.mxu0 0.0
    %126 = vmatprep.subr.mxu0 0.0
    %127 = vmatpush2.msra.mxu0 0.0
    %128 = vmatprep.subr.mxu0 0.0
    %129 = vmatpush2.msra.mxu0 0.0
    %130 = vmatprep.subr.mxu0 0.0
    %131 = vmatpush2.msra.mxu0 0.0
    %132 = vmatprep.subr.mxu0 0.0
    %133 = vmatpush2.msra.mxu0 0.0
    %134 = vmatprep.subr.mxu0 0.0
    %135 = vmatpush2.msra.mxu0 0.0
    %136 = vmatprep.subr.mxu0 0.0
    %137 = vmatpush2.msra.mxu0 0.0
    %138 = vmatprep.mubr.f32.mxu0 0.0
    %139 = vmatmul.mubr.f32.gmra.mxu0 %v72
    %v140 = vpop.f32.mrf.mxu0
    %v141 = vadd.f32 %v68, %v140
    %v142 = vpop.f32.mrf.mxu0
    %143 = vdwg.mxu0
    %s144 = sld [smem:[#allocation2]]
    %v145 = vstv %s144
    %v146 = vmul.f32 %v145, %v141
    %v147 = vadd.f32 %v59, %v146
    %vm148 = vcmask 261120
    %149 = vst.msk [vmem:[#allocation9] sm:$0xff] %vm148, %v147
    // Predicated region
    $region34: #{tpu_custom_call.1} parent=1 // pred_check
      _
    $region35: #{tpu_custom_call.1} parent=1 // pred_check_branch
      %151 = sbr.rel (0) target = $region37
    $region36: #{tpu_custom_call.1} parent=1 // pred_region
      %s153 = ssub.s32 128, 128
      %154 = vsyncadd [#allocation5], %s153
      %s156 = sshll.u32 [#allocation9], 4
      %s157 = int_to_ptr.vmem [resolvable:$true] %s156
      %159 = dma.vmem_to_hbm [thread:$0]  %s157, 128, %s5, [#allocation5]
    $region37: #{tpu_custom_call.1} parent=1 // pred_fallthru
      _
    // Predicated region
    $region38: #{tpu_custom_call.1} parent=1 // pred_check
      _
    $region39: #{tpu_custom_call.1} parent=1 // pred_check_branch
      %161 = sbr.rel (0) target = $region41
    $region40: #{tpu_custom_call.1} parent=1 // pred_region
      %162 = dma.done [#allocation5], 128
    $region41: #{tpu_custom_call.1} parent=1 // pred_fallthru
      _
    %163 = vsyncpa [#allocation4], 1
    %164 = vsyncpa [#allocation7], 1
    %165 = vsyncpa [#allocation5], 1

</llo_original>
